<compile_context>
chip_gen: v7x
topology: tpu7x:2x2x1
jax: 0.10.0
libtpu: 0.0.40
codegen_flags: <defaults>
</compile_context>

<pallas_src>
import functools

import numpy as np

import jax
import jax.numpy as jnp
from jax.experimental import pallas as pl
from jax.experimental.pallas import tpu as pltpu


NODE_TILE = 128   # output rows per grid step (lane/sublane friendly)
EDGE_BLOCK = 512  # edge rows per streamed DMA block


def _block_emb_kernel(dst_ref, lo_ref, nb_ref, cl_ref,   # scalar prefetch (SMEM)
                      x_ref, hit_ref,                      # VMEM inputs
                      out_ref,                             # VMEM output
                      acc_ref,                             # VMEM scratch
                      *, node_tile, edge_block):
    """Max-aggregate one streamed edge block onto one destination-node tile.

    dst_ref : SMEM (Ep,)       int32  dst node id per sorted/padded edge
    lo_ref  : SMEM (n_tiles,)  int32  first edge-block index of tile i
    nb_ref  : SMEM (n_tiles,)  int32  number of edge blocks for tile i
    cl_ref  : SMEM (n_tiles,)  int32  clamp block index (last relevant block)
    x_ref   : VMEM (EB, D)     f32    current streamed edge-feature block
    hit_ref : VMEM (TN, 1)     f32    1.0 where node has >=1 in-edge
    out_ref : VMEM (TN, D)     f32    output node-feature tile
    acc_ref : VMEM (TN, D)     f32    running max accumulator for tile i
    """
    i = pl.program_id(0)   # node tile (parallel)
    j = pl.program_id(1)   # edge block within the tile's CSR range (arbitrary)

    @pl.when(j == 0)
    def _init():
        acc_ref[...] = jnp.full_like(acc_ref, -jnp.inf)

    # Fold this edge block only if it belongs to tile i's CSR range.
    @pl.when(j < nb_ref[i])
    def _fold():
        e_base = (lo_ref[i] + j) * edge_block   # global index of first edge row
        row_base = i * node_tile                # first global node id of tile i

        @pl.loop(0, edge_block)
        def _edge(k):
            r = dst_ref[e_base + k] - row_base  # local output row of this edge
            # Foreign edges in shared boundary blocks and sentinel padding rows
            # fall outside [0, node_tile) and are skipped.
            @pl.when(jnp.logical_and(r >= 0, r < node_tile))
            def _rmw():
                row = x_ref[pl.ds(k, 1), :]                       # (1, D)
                acc_ref[pl.ds(r, 1), :] = jnp.maximum(
                    acc_ref[pl.ds(r, 1), :], row)

    # Finalize once per tile: DGL max-reduce fill (no in-edges -> 0) using the
    # precomputed structural mask, so all-(-inf) features still stay -inf.
    @pl.when(j == pl.num_programs(1) - 1)
    def _finalize():
        out_ref[...] = jnp.where(hit_ref[...] > 0.0, acc_ref[...],
                                 jnp.float32(0.0)).astype(out_ref.dtype)


def build_block_emb_plan(edge_dst, num_nodes, *, node_tile=NODE_TILE,
                         edge_block=EDGE_BLOCK):
    """Host-side (numpy) CSR plan: build once per graph, reuse across forwards."""
    edge_dst = np.asarray(edge_dst, dtype=np.int32)
    e = int(edge_dst.shape[0])

    n_tiles = max(-(-num_nodes // node_tile), 1)
    n_pad = n_tiles * node_tile

    order = np.argsort(edge_dst, kind="stable").astype(np.int32)
    dst_sorted = edge_dst[order]

    n_blocks = max(-(-e // edge_block), 1)
    e_pad = n_blocks * edge_block
    # Sentinel dst = n_pad never lands inside any tile's [row_base, row_base+TN).
    dst_padded = np.concatenate(
        [dst_sorted, np.full((e_pad - e,), n_pad, dtype=np.int32)]).astype(np.int32)

    tile_lo = np.arange(n_tiles, dtype=np.int64) * node_tile
    lo_e = np.searchsorted(dst_padded, tile_lo, side="left")
    hi_e = np.searchsorted(dst_padded, tile_lo + node_tile, side="left")
    lo_blk = np.minimum(lo_e // edge_block, n_blocks - 1).astype(np.int32)
    hi_blk = np.minimum(-(-hi_e // edge_block), n_blocks).astype(np.int32)
    nblk = np.maximum(hi_blk - lo_blk, 0).astype(np.int32)
    clamp_blk = np.maximum(hi_blk - 1, lo_blk).astype(np.int32)
    max_blocks = max(int(nblk.max()), 1)

    counts = np.bincount(dst_sorted, minlength=n_pad)[:n_pad]
    hit = (counts > 0).astype(np.float32).reshape(n_pad, 1)

    return dict(
        order=jnp.asarray(order),
        dst_sorted=jnp.asarray(dst_padded),
        lo_blk=jnp.asarray(lo_blk),
        nblk=jnp.asarray(nblk),
        clamp_blk=jnp.asarray(clamp_blk),
        hit=jnp.asarray(hit),
        num_nodes=int(num_nodes), n_tiles=n_tiles, n_pad=n_pad,
        e=e, e_pad=e_pad, n_blocks=n_blocks, max_blocks=max_blocks,
        node_tile=node_tile, edge_block=edge_block,
    )


def block_emb_forward(edge_x, plan):
    """Pallas implementation of BlockEmb.forward.

    edge_x : (E, D) float32 edge features (g.edata['x'])
    plan   : output of build_block_emb_plan for this graph
    returns: (num_nodes, D) float32 node features after max aggregation
    """
    e, d = edge_x.shape
    assert e == plan["e"], "edge feature count does not match the plan"

    node_tile = plan["node_tile"]
    edge_block = plan["edge_block"]

    # Per-call device work: permute edge features into CSR order and pad.
    x_sorted = jnp.take(edge_x.astype(jnp.float32), plan["order"], axis=0)
    pad = plan["e_pad"] - e
    if pad:
        x_sorted = jnp.concatenate(
            [x_sorted, jnp.zeros((pad, d), jnp.float32)], axis=0)

    grid_spec = pltpu.PrefetchScalarGridSpec(
        num_scalar_prefetch=4,  # dst_sorted, lo_blk, nblk, clamp_blk -> SMEM
        grid=(plan["n_tiles"], plan["max_blocks"]),
        in_specs=[
            # Streamed edge-feature block; data-dependent index_map walks the
            # tile's CSR block range and clamps (-> no re-DMA) on skipped steps.
            pl.BlockSpec(
                (edge_block, d),
                lambda i, j, dst, lo, nb, cl: (jnp.minimum(lo[i] + j, cl[i]), 0)),
            # Structural has-in-edge mask, one (TN, 1) block per node tile.
            pl.BlockSpec((node_tile, 1),
                         lambda i, j, dst, lo, nb, cl: (i, 0)),
        ],
        out_specs=pl.BlockSpec((node_tile, d),
                               lambda i, j, dst, lo, nb, cl: (i, 0)),
        scratch_shapes=[pltpu.VMEM((node_tile, d), jnp.float32)],
    )

    out_padded = pl.pallas_call(
        functools.partial(_block_emb_kernel, node_tile=node_tile,
                          edge_block=edge_block),
        out_shape=jax.ShapeDtypeStruct((plan["n_pad"], d), jnp.float32),
        grid_spec=grid_spec,
        compiler_params=pltpu.CompilerParams(
            # Node-tile axis shards across TCs (v7x); edge-block axis is a
            # sequential reduction over the tile's CSR range.
            dimension_semantics=("parallel", "arbitrary"),
        ),
    )(plan["dst_sorted"], plan["lo_blk"], plan["nblk"], plan["clamp_blk"],
      x_sorted, plan["hit"])

    return out_padded[:plan["num_nodes"]]


if __name__ == "__main__":
    # Small deterministic synthetic graph.
    N = 300    # nodes (not a multiple of the node tile -> exercises padding)
    E = 1021   # edges (not a multiple of the edge block -> exercises padding)
    D = 128    # feature width (lane-friendly)
    CONV_OUT = D  # stored-but-unused __init__ arg of BlockEmb

    key = jax.random.PRNGKey(0)
    k_x, k_dst = jax.random.split(key)

    edge_x = jax.random.normal(k_x, (E, D), dtype=jnp.float32)
    # Destination node of each edge; leave the last few nodes with no in-edges.
    edge_dst = jax.random.randint(k_dst, (E,), 0, N - 3).astype(jnp.int32)

    # Graph-structure plan built once (host-side numpy), reused per forward.
    plan = build_block_emb_plan(np.asarray(edge_dst), N)

    out = block_emb_forward(edge_x, plan)
    out = jax.block_until_ready(out)

    # Pure-JAX reference: segment max with 0 fill for empty segments (DGL).
    ref = jax.ops.segment_max(edge_x, edge_dst, num_segments=N)
    has_in_edge = jax.ops.segment_sum(jnp.ones((E,), jnp.float32), edge_dst,
                                      num_segments=N) > 0
    ref = jnp.where(has_in_edge[:, None], ref, 0.0)

    assert out.shape == (N, D)
    assert jnp.allclose(out, ref, atol=1e-6), "mismatch vs reference"
    print("KERNEL_OK")
</pallas_src>

<mosaic_0001>
module attributes {stable_mosaic.version = 11 : i64} {
  func.func @_block_emb_kernel(%arg0: i32, %arg1: i32, %arg2: memref<1024xi32, #tpu.memory_space<smem>>, %arg3: memref<3xi32, #tpu.memory_space<smem>>, %arg4: memref<3xi32, #tpu.memory_space<smem>>, %arg5: memref<3xi32, #tpu.memory_space<smem>>, %arg6: memref<512x128xf32, #tpu.memory_space<vmem>>, %arg7: memref<128x1xf32, #tpu.memory_space<vmem>>, %arg8: memref<128x128xf32, #tpu.memory_space<vmem>>, %arg9: memref<128x128xf32, #tpu.memory_space<vmem>>) attributes {dimension_semantics = [#tpu.dimension_semantics<parallel>, #tpu.dimension_semantics<arbitrary>], iteration_bounds = array<i64: 3, 2>, scalar_prefetch = 4 : i64, scratch_operands = 1 : i64, tpu.core_type = #tpu.core_type<tc>, window_params = [{transform_indices = @transform_0, window_bounds = array<i64: 512, 128>}, {transform_indices = @transform_1, window_bounds = array<i64: 128, 1>}, {transform_indices = @transform_2, window_bounds = array<i64: 128, 128>}]} {
    %c0_i32 = arith.constant 0 : i32
    %0 = arith.cmpi eq, %arg1, %c0_i32 : i32
    %1 = arith.extui %0 : i1 to i32
    %c0_i32_0 = arith.constant 0 : i32
    %2 = arith.cmpi ne, %1, %c0_i32_0 : i32
    scf.if %2 {
      %cst = arith.constant 0xFF800000 : f32
      %11 = vector.broadcast %cst : f32 to vector<128x128xf32>
      %c0 = arith.constant 0 : index
      %c0_3 = arith.constant 0 : index
      %12 = vector.load %arg9[%c0, %c0_3] : memref<128x128xf32, #tpu.memory_space<vmem>>, vector<128x128xf32>
      tpu.vector_store %arg9[%c0, %c0_3], %11 {strides = array<i32>} : memref<128x128xf32, #tpu.memory_space<vmem>>, vector<128x128xf32>,
    } else {
    }
    %3 = arith.index_cast %arg0 : i32 to index
    %4 = memref.load %arg4[%3] : memref<3xi32, #tpu.memory_space<smem>>
    %5 = arith.cmpi slt, %arg1, %4 : i32
    %6 = arith.extui %5 : i1 to i32
    %c0_i32_1 = arith.constant 0 : i32
    %7 = arith.cmpi ne, %6, %c0_i32_1 : i32
    scf.if %7 {
      %11 = arith.index_cast %arg0 : i32 to index
      %12 = memref.load %arg3[%11] : memref<3xi32, #tpu.memory_space<smem>>
      %13 = arith.addi %12, %arg1 : i32
      %c512_i32 = arith.constant 512 : i32
      %14 = arith.muli %13, %c512_i32 : i32
      %c128_i32 = arith.constant 128 : i32
      %15 = arith.muli %arg0, %c128_i32 : i32
      %c0_i32_3 = arith.constant 0 : i32
      %c512_i32_4 = arith.constant 512 : i32
      %16 = arith.addi %c0_i32_3, %c512_i32_4 : i32
      %c1_i32_5 = arith.constant 1 : i32
      scf.for %arg10 = %c0_i32_3 to %16 step %c1_i32_5  : i32 {
        %c1_i32_7 = arith.constant 1 : i32
        %17 = arith.muli %arg10, %c1_i32_7 : i32
        %c0_i32_8 = arith.constant 0 : i32
        %18 = arith.addi %c0_i32_8, %17 : i32
        %19 = arith.addi %14, %18 : i32
        %20 = arith.index_cast %19 : i32 to index
        %21 = memref.load %arg2[%20] : memref<1024xi32, #tpu.memory_space<smem>>
        %22 = arith.subi %21, %15 : i32
        %c0_i32_9 = arith.constant 0 : i32
        %23 = arith.cmpi sge, %22, %c0_i32_9 : i32
        %c128_i32_10 = arith.constant 128 : i32
        %24 = arith.cmpi slt, %22, %c128_i32_10 : i32
        %25 = arith.andi %23, %24 : i1
        %26 = arith.extui %25 : i1 to i32
        %c0_i32_11 = arith.constant 0 : i32
        %27 = arith.cmpi ne, %26, %c0_i32_11 : i32
        scf.if %27 {
          %28 = arith.index_cast %18 : i32 to index
          %c0 = arith.constant 0 : index
          %29 = vector.load %arg6[%28, %c0] : memref<512x128xf32, #tpu.memory_space<vmem>>, vector<1x128xf32>
          %30 = arith.index_cast %22 : i32 to index
          %c0_12 = arith.constant 0 : index
          %31 = vector.load %arg9[%30, %c0_12] : memref<128x128xf32, #tpu.memory_space<vmem>>, vector<1x128xf32>
          %32 = arith.maximumf %31, %29 : vector<1x128xf32>
          %33 = arith.index_cast %22 : i32 to index
          %c0_13 = arith.constant 0 : index
          %34 = vector.load %arg9[%33, %c0_13] : memref<128x128xf32, #tpu.memory_space<vmem>>, vector<1x128xf32>
          tpu.vector_store %arg9[%33, %c0_13], %32 {strides = array<i32>} : memref<128x128xf32, #tpu.memory_space<vmem>>, vector<1x128xf32>,
        } else {
        }
      }
      %c512_i32_6 = arith.constant 512 : i32
    } else {
    }
    %c1_i32 = arith.constant 1 : i32
    %8 = arith.cmpi eq, %arg1, %c1_i32 : i32
    %9 = arith.extui %8 : i1 to i32
    %c0_i32_2 = arith.constant 0 : i32
    %10 = arith.cmpi ne, %9, %c0_i32_2 : i32
    scf.if %10 {
      %c0 = arith.constant 0 : index
      %c0_3 = arith.constant 0 : index
      %11 = vector.load %arg7[%c0, %c0_3] : memref<128x1xf32, #tpu.memory_space<vmem>>, vector<128x1xf32>
      %cst = arith.constant 0.000000e+00 : f32
      %12 = vector.broadcast %cst : f32 to vector<128x1xf32>
      %13 = arith.cmpf ogt, %11, %12 : vector<128x1xf32>
      %c0_4 = arith.constant 0 : index
      %c0_5 = arith.constant 0 : index
      %14 = vector.load %arg9[%c0_4, %c0_5] : memref<128x128xf32, #tpu.memory_space<vmem>>, vector<128x128xf32>
      %cst_6 = arith.constant 0.000000e+00 : f32
      %15 = vector.shape_cast %13 : vector<128x1xi1> to vector<128x1xi1>
      %16 = vector.broadcast %15 : vector<128x1xi1> to vector<128x128xi1>
      %17 = vector.broadcast %cst_6 : f32 to vector<128x128xf32>
      %18 = arith.select %16, %14, %17 : vector<128x128xi1>, vector<128x128xf32>
      %c0_7 = arith.constant 0 : index
      %c0_8 = arith.constant 0 : index
      %19 = vector.load %arg8[%c0_7, %c0_8] : memref<128x128xf32, #tpu.memory_space<vmem>>, vector<128x128xf32>
      tpu.vector_store %arg8[%c0_7, %c0_8], %18 {strides = array<i32>} : memref<128x128xf32, #tpu.memory_space<vmem>>, vector<128x128xf32>,
    } else {
    }
    return
  }
  func.func @transform_0(%arg0: i32, %arg1: i32, %arg2: memref<1024xi32, #tpu.memory_space<smem>>, %arg3: memref<3xi32, #tpu.memory_space<smem>>, %arg4: memref<3xi32, #tpu.memory_space<smem>>, %arg5: memref<3xi32, #tpu.memory_space<smem>>) -> (i32, i32) {
    %0 = arith.index_cast %arg0 : i32 to index
    %1 = memref.load %arg3[%0] : memref<3xi32, #tpu.memory_space<smem>>
    %2 = arith.addi %1, %arg1 : i32
    %3 = arith.index_cast %arg0 : i32 to index
    %4 = memref.load %arg5[%3] : memref<3xi32, #tpu.memory_space<smem>>
    %5 = arith.minsi %2, %4 : i32
    %c0_i32 = arith.constant 0 : i32
    %c0_i32_0 = arith.constant 0 : i32
    return %5, %c0_i32 : i32, i32
  }
  func.func @transform_1(%arg0: i32, %arg1: i32, %arg2: memref<1024xi32, #tpu.memory_space<smem>>, %arg3: memref<3xi32, #tpu.memory_space<smem>>, %arg4: memref<3xi32, #tpu.memory_space<smem>>, %arg5: memref<3xi32, #tpu.memory_space<smem>>) -> (i32, i32) {
    %c0_i32 = arith.constant 0 : i32
    %c0_i32_0 = arith.constant 0 : i32
    return %arg0, %c0_i32 : i32, i32
  }
  func.func @transform_2(%arg0: i32, %arg1: i32, %arg2: memref<1024xi32, #tpu.memory_space<smem>>, %arg3: memref<3xi32, #tpu.memory_space<smem>>, %arg4: memref<3xi32, #tpu.memory_space<smem>>, %arg5: memref<3xi32, #tpu.memory_space<smem>>) -> (i32, i32) {
    %c0_i32 = arith.constant 0 : i32
    %c0_i32_0 = arith.constant 0 : i32
    return %arg0, %c0_i32 : i32, i32
  }
}

</mosaic_0001>

<llo_original>
// kernel: tpu_custom_call.1
$region0: #{tpu_custom_call.1}
  #allocation0 [shape = 'u32[]', space=smem, size = 0x4, offset = 0x4, fixed_abs, tag = 'smem constant byte address 0x4 - core index']
  #allocation1 [shape = 'u32[144,128]{1,0:T(1,128)}', space=vmem, size = 0x12000, scoped, tag = 'internal scratch']
  #allocation2 [shape = 'f32[128,128]{1,0:T(8,128)}', space=vmem, size = 0x10000, scoped, tag = 'scratch operand']
  #allocation3 [shape = 's32[1]{0}', space=sflag, size = 0x4, scoped, tag = 'scoped memory for tpu_custom_call.1']
  #allocation4 [shape = 'u8[4096]{0}', space=smem, size = 0x1000, scoped, tag = 'prefetched SMEM operand 0']
  #allocation5 [shape = 'u8[512]{0}', space=smem, size = 0x200, scoped, tag = 'prefetched SMEM operand 1']
  #allocation6 [shape = 'u8[512]{0}', space=smem, size = 0x200, scoped, tag = 'prefetched SMEM operand 2']
  #allocation7 [shape = 'u8[512]{0}', space=smem, size = 0x200, scoped, tag = 'prefetched SMEM operand 3']
  %s0 = inlined_call_operand.vmem [shape: s32[1024], index: 0, kind: input, shape index: {}]
  %s1 = inlined_call_operand.vmem [shape: s32[3], index: 1, kind: input, shape index: {}]
  %s2 = inlined_call_operand.vmem [shape: s32[3], index: 2, kind: input, shape index: {}]
  %s3 = inlined_call_operand.vmem [shape: s32[3], index: 3, kind: input, shape index: {}]
  %s4 = inlined_call_operand.hbm [shape: f32[1024,128], index: 4, kind: input, shape index: {}]
  %s5 = inlined_call_operand.vmem [shape: f32[384,1], index: 5, kind: input, shape index: {}]
  %s6 = inlined_call_operand.hbm [shape: f32[384,128], index: 6, kind: output, shape index: {}]
  %s7 = sld [smem:[#allocation0]]
  $region68: #{tpu_custom_call.1} parent=0
    _
  %s9 = ssub.s32 1, %s7
  %s10 = scalar_select 0, %s9, %s7
  %s11 = sshll.u32 %s0, 4
  %s12 = int_to_ptr.vmem [resolvable:$true] %s11
  %14 = dma.vmem_to_smem %s12, 128, [#allocation4], [#allocation3]
  %s15 = sshll.u32 %s1, 4
  %s16 = int_to_ptr.vmem [resolvable:$true] %s15
  %18 = dma.vmem_to_smem %s16, 16, [#allocation5], [#allocation3]
  %s19 = sshll.u32 %s2, 4
  %s20 = int_to_ptr.vmem [resolvable:$true] %s19
  %22 = dma.vmem_to_smem %s20, 16, [#allocation6], [#allocation3]
  %s23 = sshll.u32 %s3, 4
  %s24 = int_to_ptr.vmem [resolvable:$true] %s23
  %26 = dma.vmem_to_smem %s24, 16, [#allocation7], [#allocation3]
  %27 = dma.done [#allocation3], 176
  %28 = sfence
  $region1: #{tpu_custom_call.1} parent=0
    #allocation8 [shape = 'u8[524288]{0}', space=vmem, size = 0x80000, scoped, tag = 'input window, operand 4']
    #allocation9 [shape = 's32[2]{0}', space=sflag, size = 0x8, scoped, tag = 'scoped memory for tpu_custom_call.1']
    #allocation10 [shape = 's32[2]{0}', space=sflag, size = 0x8, scoped, tag = 'scoped memory for tpu_custom_call.1']
    #allocation11 [shape = 'u8[131072]{0}', space=vmem, size = 0x20000, scoped, tag = 'output window, operand 0']
    %29 = vsyncpa [#allocation9], 0
    %s30 = scalar_lea.sflag [#allocation9], 1
    %31 = vsyncpa %s30, 0
    %32 = vsyncpa [#allocation10], 0
    %s33 = scalar_lea.sflag [#allocation10], 1
    %34 = vsyncpa %s33, 0
    loop: start=0, step=1, limit=8
    $region2: #{tpu_custom_call.1} parent=1 // loop_pre_header
      _
    $region3: #{tpu_custom_call.1} parent=1 // loop_header
      %s36 = sphi 0, %s40
      %p37 = scmp.ge.s32.totalorder %s36, 8
      %s43 = sphi 0, %s55
      %s44 = sphi 0, %s51
      %s45 = sphi 0, %s43
      %s46 = sphi 0, %s44
      %s47 = sphi 0, %s45
      %s48 = sphi 0, %s46
      %s68 = sphi 0, %s70
      %s71 = sphi 0, %s68
      %s72 = sphi 0, %s71
      %s88 = sphi 0, %s72
      %s94 = sphi 0, %s96
      %s97 = sphi 0, %s94
      %s98 = sphi 0, %s97
      %s114 = sphi 0, %s98
      %s120 = sphi 0, %s122
      %s123 = sphi 0, %s120
      %s124 = sphi 0, %s123
      %s140 = sphi 0, %s124
    $region4: #{tpu_custom_call.1} parent=1 // loop_header_branch
      %39 = sbr.rel (%p37) target = $region8
    $region5: #{tpu_custom_call.1} parent=1 // loop_body
      %s41 = ssub.s32 %s36, 1
      %s42 = ssub.s32 %s36, 2
      %s49 = sadd.s32 1, %s44
      %p50 = scmp.ge.s32.totalorder %s49, 2
      %s51 = scalar_select %p50, 0, %s49
      %s52 = sadd.s32 1, %s43
      %s53 = scalar_select %p50, %s52, %s43
      %p54 = scmp.ge.s32.totalorder %s53, 3
      %s55 = scalar_select %p54, 0, %s53
      %s56 = sld [smem:[#allocation5 + %s43]]
      %s57 = sadd.s32 %s56, %s44
      %s58 = sld [smem:[#allocation7 + %s43]]
      %p59 = scmp.lt.s32.totalorder %s57, %s58
      %s60 = scalar_select %p59, %s57, %s58
      %s61 = sld [smem:[#allocation5 + %s55]]
      %s62 = sadd.s32 %s61, %s51
      %s63 = sld [smem:[#allocation7 + %s55]]
      %p64 = scmp.lt.s32.totalorder %s62, %s63
      %s65 = scalar_select %p64, %s62, %s63
      %s66 = ssub.s32 %s60, %s65
      %p67 = scmp.eq.s32.totalorder %s66, 0
      %s69 = sadd.s32 %s68, 1
      %s70 = scalar_select %p67, %s68, %s69
      %p73 = pneg %p67
      %p74 = scmp.eq.s32.totalorder %s36, 5
      %p75 = por %p73, %p74
      %p76 = scmp.ne.s32.totalorder %s68, %s71
      %p77 = scmp.eq.s32.totalorder %s36, 0
      %p78 = por %p76, %p77
      %p79 = scmp.ne.s32.totalorder %s68, %s71
      %p80 = scmp.eq.s32.totalorder %s41, 5
      %p81 = por %p79, %p80
      %p82 = scmp.ne.s32.totalorder %s71, %s72
      %p83 = scmp.eq.s32.totalorder %s41, 0
      %p84 = por %p82, %p83
      %p85 = scmp.ne.s32.totalorder %s71, %s72
      %p86 = scmp.eq.s32.totalorder %s42, 5
      %p87 = por %p85, %p86
      %p89 = scmp.ne.s32.totalorder %s72, %s88
      %p90 = scmp.eq.s32.totalorder %s42, 0
      %p91 = por %p89, %p90
      %s92 = ssub.s32 %s43, %s55
      %p93 = scmp.eq.s32.totalorder %s92, 0
      %s95 = sadd.s32 %s94, 1
      %s96 = scalar_select %p93, %s94, %s95
      %p99 = pneg %p93
      %p100 = scmp.eq.s32.totalorder %s36, 5
      %p101 = por %p99, %p100
      %p102 = scmp.ne.s32.totalorder %s94, %s97
      %p103 = scmp.eq.s32.totalorder %s36, 0
      %p104 = por %p102, %p103
      %p105 = scmp.ne.s32.totalorder %s94, %s97
      %p106 = scmp.eq.s32.totalorder %s41, 5
      %p107 = por %p105, %p106
      %p108 = scmp.ne.s32.totalorder %s97, %s98
      %p109 = scmp.eq.s32.totalorder %s41, 0
      %p110 = por %p108, %p109
      %p111 = scmp.ne.s32.totalorder %s97, %s98
      %p112 = scmp.eq.s32.totalorder %s42, 5
      %p113 = por %p111, %p112
      %p115 = scmp.ne.s32.totalorder %s98, %s114
      %p116 = scmp.eq.s32.totalorder %s42, 0
      %p117 = por %p115, %p116
      %s118 = ssub.s32 %s43, %s55
      %p119 = scmp.eq.s32.totalorder %s118, 0
      %s121 = sadd.s32 %s120, 1
      %s122 = scalar_select %p119, %s120, %s121
      %p125 = pneg %p119
      %p126 = scmp.eq.s32.totalorder %s36, 5
      %p127 = por %p125, %p126
      %p128 = scmp.ne.s32.totalorder %s120, %s123
      %p129 = scmp.eq.s32.totalorder %s36, 0
      %p130 = por %p128, %p129
      %p131 = scmp.ne.s32.totalorder %s120, %s123
      %p132 = scmp.eq.s32.totalorder %s41, 5
      %p133 = por %p131, %p132
      %p134 = scmp.ne.s32.totalorder %s123, %s124
      %p135 = scmp.eq.s32.totalorder %s41, 0
      %p136 = por %p134, %p135
      %p137 = scmp.ne.s32.totalorder %s123, %s124
      %p138 = scmp.eq.s32.totalorder %s42, 5
      %p139 = por %p137, %p138
      %p141 = scmp.ne.s32.totalorder %s124, %s140
      %p142 = scmp.eq.s32.totalorder %s42, 0
      %p143 = por %p141, %p142
      %p144 = scmp.le.s32.totalorder 1, %s36
      %p145 = scmp.lt.s32.totalorder %s36, 7
      %p146 = pnand %p144, %p145
      %p147 = pneg %p146
      // Predicated region
      $region9: #{tpu_custom_call.1} parent=5 // pred_check
        _
      $region10: #{tpu_custom_call.1} parent=5 // pred_check_branch
        %149 = sbr.rel (%p146) target = $region12
      $region11: #{tpu_custom_call.1} parent=5 // pred_region
        %s150 = ssub.s32 %s36, 1
      $region12: #{tpu_custom_call.1} parent=5 // pred_fallthru
        _
      %p151 = scmp.lt.s32.totalorder %s36, 6
      // Predicated region
      $region13: #{tpu_custom_call.1} parent=5 // pred_check
        %p152 = pneg %p151
      $region14: #{tpu_custom_call.1} parent=5 // pred_check_branch
        %154 = sbr.rel (%p152) target = $region16
      $region15: #{tpu_custom_call.1} parent=5 // pred_region
        // Predicated region
        $region17: #{tpu_custom_call.1} parent=15 // pred_check
          %p155 = pneg %p78
        $region18: #{tpu_custom_call.1} parent=15 // pred_check_branch
          %157 = sbr.rel (%p155) target = $region20
        $region19: #{tpu_custom_call.1} parent=15 // pred_region
          %s158 = sand.u32 %s68, 1
          %s159 = scalar_lea.sflag [#allocation9], %s158
          %s160 = sand.u32 %s68, 1
          %s161 = smul.addr %s160, 512
          %s162 = scalar_lea.vmem [#allocation8], %s161
          %s163 = sld [smem:[#allocation5 + %s43]]
          %s164 = sadd.s32 %s163, %s44
          %s165 = sld [smem:[#allocation7 + %s43]]
          %p166 = scmp.lt.s32.totalorder %s164, %s165
          %s167 = scalar_select %p166, %s164, %s165
          %s168 = smul.u32 64, %s167
          %s170 = ssub.s32 8192, 8192
          %171 = vsyncadd %s159, %s170
          %s172 = smul.addr %s168, 128
          %s173 = scalar_lea.hbm %s4, %s172
          %s174 = sshll.u32 %s162, 4
          %s175 = int_to_ptr.vmem [resolvable:$true] %s174
          %180 = dma.hbm_to_vmem [thread:$0]  %s173, 8192, %s175, %s159, 128, 128, 8
        $region20: #{tpu_custom_call.1} parent=15 // pred_fallthru
          _
        // Predicated region
        $region21: #{tpu_custom_call.1} parent=15 // pred_check
          %p181 = pneg %p104
        $region22: #{tpu_custom_call.1} parent=15 // pred_check_branch
          %183 = sbr.rel (%p181) target = $region24
        $region23: #{tpu_custom_call.1} parent=15 // pred_region
          %s184 = smul.u32 16, %s43
          %p185 = scmp.lt.s32.totalorder %s184, 47
          %s186 = scalar_select %p185, %s184, 47
          %s187 = smul.addr %s186, 8
          %s188 = scalar_lea.vmem %s5, %s187
          %s189 = smul.u32 16, %s43
        $region24: #{tpu_custom_call.1} parent=15 // pred_fallthru
          _
      $region16: #{tpu_custom_call.1} parent=5 // pred_fallthru
        _
      %p190 = scmp.le.s32.totalorder 1, %s36
      %p191 = scmp.lt.s32.totalorder %s36, 7
      %p192 = pnand %p190, %p191
      %p193 = pneg %p192
      // Predicated region
      $region25: #{tpu_custom_call.1} parent=5 // pred_check
        _
      $region26: #{tpu_custom_call.1} parent=5 // pred_check_branch
        %195 = sbr.rel (%p192) target = $region28
      $region27: #{tpu_custom_call.1} parent=5 // pred_region
        %s196 = ssub.s32 %s36, 1
        %s197 = sand.u32 %s71, 1
        %s198 = scalar_lea.sflag [#allocation9], %s197
        %s199 = sand.u32 %s71, 1
        %s200 = smul.addr %s199, 512
        %s201 = scalar_lea.vmem [#allocation8], %s200
        // Predicated region
        $region29: #{tpu_custom_call.1} parent=27 // pred_check
          %p202 = pneg %p84
        $region30: #{tpu_custom_call.1} parent=27 // pred_check_branch
          %204 = sbr.rel (%p202) target = $region32
        $region31: #{tpu_custom_call.1} parent=27 // pred_region
          %205 = dma.done %s198, 8192
        $region32: #{tpu_custom_call.1} parent=27 // pred_fallthru
          _
        %s206 = sand.u32 %s71, 1
        %s207 = scalar_lea.sflag [#allocation9], %s206
        %s208 = sand.u32 %s71, 1
        %s209 = smul.addr %s208, 512
        %s210 = scalar_lea.vmem [#allocation8], %s209
        %p211 = pneg %p84
        %p212 = pneg %p81
        %s213 = smul.u32 16, %s45
        %p214 = scmp.lt.s32.totalorder %s213, 47
        %s215 = scalar_select %p214, %s213, 47
        %s216 = smul.addr %s215, 8
        %s217 = scalar_lea.vmem %s5, %s216
        %p218 = pneg %p110
        %p219 = pneg %p107
        %p220 = pneg %p136
        %p221 = pneg %p133
        %s222 = sand.u32 %s123, 1
        %s223 = scalar_lea.sflag [#allocation10], %s222
        %s224 = sand.u32 %s123, 1
        %s225 = smul.addr %s224, 128
        %s226 = scalar_lea.vmem [#allocation11], %s225
        %s227 = sld [smem:[#allocation5 + %s45]]
        %s228 = sadd.s32 %s227, %s46
        %s229 = sld [smem:[#allocation7 + %s45]]
        %p230 = scmp.lt.s32.totalorder %s228, %s229
        %s231 = scalar_select %p230, %s228, %s229
        %s232 = smul.u32 64, %s231
        %s233 = smul.u32 16, %s45
        %p234 = scmp.lt.s32.totalorder %s233, 47
        %s235 = scalar_select %p234, %s233, 47
        %s236 = smul.addr %s235, 8
        %s237 = scalar_lea.vmem %s5, %s236
        %s238 = smul.u32 16, %s45
        %s239 = smul.u32 16, %s45
        %p240 = scmp.eq.s32.totalorder %s46, 0
        // Predicated region
        $region33: #{tpu_custom_call.1} parent=27 // pred_check
          %p241 = pneg %p240
        $region34: #{tpu_custom_call.1} parent=27 // pred_check_branch
          %243 = sbr.rel (%p241) target = $region36
        $region35: #{tpu_custom_call.1} parent=27 // pred_region
          %244 = vst [vmem:[#allocation2] sm:$0xff] -inf
          %245 = vst [vmem:[#allocation2 + $0x8] sm:$0xff] -inf
          %246 = vst [vmem:[#allocation2 + $0x10] sm:$0xff] -inf
          %247 = vst [vmem:[#allocation2 + $0x18] sm:$0xff] -inf
          %248 = vst [vmem:[#allocation2 + $0x20] sm:$0xff] -inf
          %249 = vst [vmem:[#allocation2 + $0x28] sm:$0xff] -inf
          %250 = vst [vmem:[#allocation2 + $0x30] sm:$0xff] -inf
          %251 = vst [vmem:[#allocation2 + $0x38] sm:$0xff] -inf
          %252 = vst [vmem:[#allocation2 + $0x40] sm:$0xff] -inf
          %253 = vst [vmem:[#allocation2 + $0x48] sm:$0xff] -inf
          %254 = vst [vmem:[#allocation2 + $0x50] sm:$0xff] -inf
          %255 = vst [vmem:[#allocation2 + $0x58] sm:$0xff] -inf
          %256 = vst [vmem:[#allocation2 + $0x60] sm:$0xff] -inf
          %257 = vst [vmem:[#allocation2 + $0x68] sm:$0xff] -inf
          %258 = vst [vmem:[#allocation2 + $0x70] sm:$0xff] -inf
          %259 = vst [vmem:[#allocation2 + $0x78] sm:$0xff] -inf
        $region36: #{tpu_custom_call.1} parent=27 // pred_fallthru
          _
        %s260 = sld [smem:[#allocation6 + %s45]]
        %p261 = scmp.lt.s32.totalorder %s46, %s260
        // Predicated region
        $region37: #{tpu_custom_call.1} parent=27 // pred_check
          %p262 = pneg %p261
        $region38: #{tpu_custom_call.1} parent=27 // pred_check_branch
          %264 = sbr.rel (%p262) target = $region40
        $region39: #{tpu_custom_call.1} parent=27 // pred_region
          %s265 = sld [smem:[#allocation5 + %s45]]
          %s266 = sadd.s32 %s265, %s46
          %s267 = smul.u32 %s266, 512
          %s268 = smul.u32 %s45, 128
          loop: start=0, step=1, limit=512
          $region41: #{tpu_custom_call.1} parent=39 // loop_pre_header
            _
          $region42: #{tpu_custom_call.1} parent=39 // loop_header
            %s270 = sphi 0, %s274
            %p271 = scmp.ge.s32.totalorder %s270, 512
          $region43: #{tpu_custom_call.1} parent=39 // loop_header_branch
            %273 = sbr.rel (%p271) target = $region47
          $region44: #{tpu_custom_call.1} parent=39 // loop_body
            %s275 = sadd.s32 %s267, %s270
            %s276 = sld [smem:[#allocation4 + %s275]]
            %s277 = ssub.s32 %s276, %s268
            %p278 = scmp.ge.s32.totalorder %s277, 0
            %p279 = scmp.lt.s32.totalorder %s277, 128
            %p280 = pnand %p278, %p279
            %p281 = pneg %p280
            // Predicated region
            $region48: #{tpu_custom_call.1} parent=44 // pred_check
              _
            $region49: #{tpu_custom_call.1} parent=44 // pred_check_branch
              %283 = sbr.rel (%p280) target = $region51
            $region50: #{tpu_custom_call.1} parent=44 // pred_region
              %s284 = scalar_lea.vmem %s201, %s270 [#allocation8]
              %v285 = vld [vmem:[%s284] sm:$0x1]
              %s286 = scalar_lea.vmem [#allocation2], %s277
              %v287 = vld [vmem:[%s286] sm:$0x1]
              %v288 = vmax.f32 %v287, %v285
              %289 = vst [vmem:[%s286] sm:$0x1] %v288
            $region51: #{tpu_custom_call.1} parent=44 // pred_fallthru
              _
          $region45: #{tpu_custom_call.1} parent=39 // loop_footer
            %s274 = sadd.s32 1, %s270
          $region46: #{tpu_custom_call.1} parent=39 // loop_footer_branch
            %269 = sbr.rel target = $region42
          $region47: #{tpu_custom_call.1} parent=39 // loop_exit
            _
        $region40: #{tpu_custom_call.1} parent=27 // pred_fallthru
          _
        %p290 = scmp.eq.s32.totalorder %s46, 1
        // Predicated region
        $region52: #{tpu_custom_call.1} parent=27 // pred_check
          %p291 = pneg %p290
        $region53: #{tpu_custom_call.1} parent=27 // pred_check_branch
          %293 = sbr.rel (%p291) target = $region55
        $region54: #{tpu_custom_call.1} parent=27 // pred_region
          %v294 = vld [vmem:[%s237] sm:$0xff]
          %v295 = vld [vmem:[%s237 + $0x8] sm:$0xff]
          %v296 = vld [vmem:[%s237 + $0x10] sm:$0xff]
          %v297 = vld [vmem:[%s237 + $0x18] sm:$0xff]
          %v298 = vld [vmem:[%s237 + $0x20] sm:$0xff]
          %v299 = vld [vmem:[%s237 + $0x28] sm:$0xff]
          %v300 = vld [vmem:[%s237 + $0x30] sm:$0xff]
          %v301 = vld [vmem:[%s237 + $0x38] sm:$0xff]
          %v302 = vld [vmem:[%s237 + $0x40] sm:$0xff]
          %v303 = vld [vmem:[%s237 + $0x48] sm:$0xff]
          %v304 = vld [vmem:[%s237 + $0x50] sm:$0xff]
          %v305 = vld [vmem:[%s237 + $0x58] sm:$0xff]
          %v306 = vld [vmem:[%s237 + $0x60] sm:$0xff]
          %v307 = vld [vmem:[%s237 + $0x68] sm:$0xff]
          %v308 = vld [vmem:[%s237 + $0x70] sm:$0xff]
          %v309 = vld [vmem:[%s237 + $0x78] sm:$0xff]
          %vm310 = vcmp.gt.f32.partialorder %v294, 0.0
          %vm311 = vcmp.gt.f32.partialorder %v295, 0.0
          %vm312 = vcmp.gt.f32.partialorder %v296, 0.0
          %vm313 = vcmp.gt.f32.partialorder %v297, 0.0
          %vm314 = vcmp.gt.f32.partialorder %v298, 0.0
          %vm315 = vcmp.gt.f32.partialorder %v299, 0.0
          %vm316 = vcmp.gt.f32.partialorder %v300, 0.0
          %vm317 = vcmp.gt.f32.partialorder %v301, 0.0
          %vm318 = vcmp.gt.f32.partialorder %v302, 0.0
          %vm319 = vcmp.gt.f32.partialorder %v303, 0.0
          %vm320 = vcmp.gt.f32.partialorder %v304, 0.0
          %vm321 = vcmp.gt.f32.partialorder %v305, 0.0
          %vm322 = vcmp.gt.f32.partialorder %v306, 0.0
          %vm323 = vcmp.gt.f32.partialorder %v307, 0.0
          %vm324 = vcmp.gt.f32.partialorder %v308, 0.0
          %vm325 = vcmp.gt.f32.partialorder %v309, 0.0
          %v326 = vld [vmem:[#allocation2] sm:$0xff]
          %v327 = vld [vmem:[#allocation2 + $0x8] sm:$0xff]
          %v328 = vld [vmem:[#allocation2 + $0x10] sm:$0xff]
          %v329 = vld [vmem:[#allocation2 + $0x18] sm:$0xff]
          %v330 = vld [vmem:[#allocation2 + $0x20] sm:$0xff]
          %v331 = vld [vmem:[#allocation2 + $0x28] sm:$0xff]
          %v332 = vld [vmem:[#allocation2 + $0x30] sm:$0xff]
          %v333 = vld [vmem:[#allocation2 + $0x38] sm:$0xff]
          %v334 = vld [vmem:[#allocation2 + $0x40] sm:$0xff]
          %v335 = vld [vmem:[#allocation2 + $0x48] sm:$0xff]
          %v336 = vld [vmem:[#allocation2 + $0x50] sm:$0xff]
          %v337 = vld [vmem:[#allocation2 + $0x58] sm:$0xff]
          %v338 = vld [vmem:[#allocation2 + $0x60] sm:$0xff]
          %v339 = vld [vmem:[#allocation2 + $0x68] sm:$0xff]
          %v340 = vld [vmem:[#allocation2 + $0x70] sm:$0xff]
          %v341 = vld [vmem:[#allocation2 + $0x78] sm:$0xff]
          %v342 = vsel %vm310, 1, 0
          %v343 = vsel %vm311, 1, 0
          %v344 = vsel %vm312, 1, 0
          %v345 = vsel %vm313, 1, 0
          %v346 = vsel %vm314, 1, 0
          %v347 = vsel %vm315, 1, 0
          %v348 = vsel %vm316, 1, 0
          %v349 = vsel %vm317, 1, 0
          %v350 = vsel %vm318, 1, 0
          %v351 = vsel %vm319, 1, 0
          %v352 = vsel %vm320, 1, 0
          %v353 = vsel %vm321, 1, 0
          %v354 = vsel %vm322, 1, 0
          %v355 = vsel %vm323, 1, 0
          %v356 = vsel %vm324, 1, 0
          %v357 = vsel %vm325, 1, 0
          %358 = vset.pattern.permute.xlu0 0
          %359 = vperm.xlu0 %358, %v342
          %v360 = vpop.permute.xlu0 %359
          %361 = vset.pattern.permute.xlu0 0
          %362 = vperm.xlu0 %361, %v343
          %v363 = vpop.permute.xlu0 %362
          %364 = vset.pattern.permute.xlu0 0
          %365 = vperm.xlu0 %364, %v344
          %v366 = vpop.permute.xlu0 %365
          %367 = vset.pattern.permute.xlu0 0
          %368 = vperm.xlu0 %367, %v345
          %v369 = vpop.permute.xlu0 %368
          %370 = vset.pattern.permute.xlu0 0
          %371 = vperm.xlu0 %370, %v346
          %v372 = vpop.permute.xlu0 %371
          %373 = vset.pattern.permute.xlu0 0
          %374 = vperm.xlu0 %373, %v347
          %v375 = vpop.permute.xlu0 %374
          %376 = vset.pattern.permute.xlu0 0
          %377 = vperm.xlu0 %376, %v348
          %v378 = vpop.permute.xlu0 %377
          %379 = vset.pattern.permute.xlu0 0
          %380 = vperm.xlu0 %379, %v349
          %v381 = vpop.permute.xlu0 %380
          %382 = vset.pattern.permute.xlu0 0
          %383 = vperm.xlu0 %382, %v350
          %v384 = vpop.permute.xlu0 %383
          %385 = vset.pattern.permute.xlu0 0
          %386 = vperm.xlu0 %385, %v351
          %v387 = vpop.permute.xlu0 %386
          %388 = vset.pattern.permute.xlu0 0
          %389 = vperm.xlu0 %388, %v352
          %v390 = vpop.permute.xlu0 %389
          %391 = vset.pattern.permute.xlu0 0
          %392 = vperm.xlu0 %391, %v353
          %v393 = vpop.permute.xlu0 %392
          %394 = vset.pattern.permute.xlu0 0
          %395 = vperm.xlu0 %394, %v354
          %v396 = vpop.permute.xlu0 %395
          %397 = vset.pattern.permute.xlu0 0
          %398 = vperm.xlu0 %397, %v355
          %v399 = vpop.permute.xlu0 %398
          %400 = vset.pattern.permute.xlu0 0
          %401 = vperm.xlu0 %400, %v356
          %v402 = vpop.permute.xlu0 %401
          %403 = vset.pattern.permute.xlu0 0
          %404 = vperm.xlu0 %403, %v357
          %v405 = vpop.permute.xlu0 %404
          %vm406 = vcmp.eq.s32.totalorder %v360, 1
          %vm407 = vcmp.eq.s32.totalorder %v363, 1
          %vm408 = vcmp.eq.s32.totalorder %v366, 1
          %vm409 = vcmp.eq.s32.totalorder %v369, 1
          %vm410 = vcmp.eq.s32.totalorder %v372, 1
          %vm411 = vcmp.eq.s32.totalorder %v375, 1
          %vm412 = vcmp.eq.s32.totalorder %v378, 1
          %vm413 = vcmp.eq.s32.totalorder %v381, 1
          %vm414 = vcmp.eq.s32.totalorder %v384, 1
          %vm415 = vcmp.eq.s32.totalorder %v387, 1
          %vm416 = vcmp.eq.s32.totalorder %v390, 1
          %vm417 = vcmp.eq.s32.totalorder %v393, 1
          %vm418 = vcmp.eq.s32.totalorder %v396, 1
          %vm419 = vcmp.eq.s32.totalorder %v399, 1
          %vm420 = vcmp.eq.s32.totalorder %v402, 1
          %vm421 = vcmp.eq.s32.totalorder %v405, 1
          %v422 = vsel %vm406, %v326, 0.0
          %v423 = vsel %vm407, %v327, 0.0
          %v424 = vsel %vm408, %v328, 0.0
          %v425 = vsel %vm409, %v329, 0.0
          %v426 = vsel %vm410, %v330, 0.0
          %v427 = vsel %vm411, %v331, 0.0
          %v428 = vsel %vm412, %v332, 0.0
          %v429 = vsel %vm413, %v333, 0.0
          %v430 = vsel %vm414, %v334, 0.0
          %v431 = vsel %vm415, %v335, 0.0
          %v432 = vsel %vm416, %v336, 0.0
          %v433 = vsel %vm417, %v337, 0.0
          %v434 = vsel %vm418, %v338, 0.0
          %v435 = vsel %vm419, %v339, 0.0
          %v436 = vsel %vm420, %v340, 0.0
          %v437 = vsel %vm421, %v341, 0.0
          %438 = vst [vmem:[%s226] sm:$0xff] %v422
          %439 = vst [vmem:[%s226 + $0x8] sm:$0xff] %v423
          %440 = vst [vmem:[%s226 + $0x10] sm:$0xff] %v424
          %441 = vst [vmem:[%s226 + $0x18] sm:$0xff] %v425
          %442 = vst [vmem:[%s226 + $0x20] sm:$0xff] %v426
          %443 = vst [vmem:[%s226 + $0x28] sm:$0xff] %v427
          %444 = vst [vmem:[%s226 + $0x30] sm:$0xff] %v428
          %445 = vst [vmem:[%s226 + $0x38] sm:$0xff] %v429
          %446 = vst [vmem:[%s226 + $0x40] sm:$0xff] %v430
          %447 = vst [vmem:[%s226 + $0x48] sm:$0xff] %v431
          %448 = vst [vmem:[%s226 + $0x50] sm:$0xff] %v432
          %449 = vst [vmem:[%s226 + $0x58] sm:$0xff] %v433
          %450 = vst [vmem:[%s226 + $0x60] sm:$0xff] %v434
          %451 = vst [vmem:[%s226 + $0x68] sm:$0xff] %v435
          %452 = vst [vmem:[%s226 + $0x70] sm:$0xff] %v436
          %453 = vst [vmem:[%s226 + $0x78] sm:$0xff] %v437
        $region55: #{tpu_custom_call.1} parent=27 // pred_fallthru
          _
        %s454 = sand.u32 %s123, 1
        %s455 = scalar_lea.sflag [#allocation10], %s454
        %s456 = sand.u32 %s123, 1
        %s457 = smul.addr %s456, 128
        %s458 = scalar_lea.vmem [#allocation11], %s457
        // Predicated region
        $region56: #{tpu_custom_call.1} parent=27 // pred_check
          %p459 = pneg %p133
        $region57: #{tpu_custom_call.1} parent=27 // pred_check_branch
          %461 = sbr.rel (%p459) target = $region59
        $region58: #{tpu_custom_call.1} parent=27 // pred_region
          %s462 = smul.u32 16, %s45
          %s464 = ssub.s32 2048, 2048
          %465 = vsyncadd %s455, %s464
          %s466 = smul.addr %s462, 128
          %s467 = scalar_lea.hbm %s6, %s466
          %s468 = sshll.u32 %s458, 4
          %s469 = int_to_ptr.vmem [resolvable:$true] %s468
          %474 = dma.vmem_to_hbm [thread:$0]  %s469, 2048, %s467, %s455, 128, 128, 8
        $region59: #{tpu_custom_call.1} parent=27 // pred_fallthru
          _
      $region28: #{tpu_custom_call.1} parent=5 // pred_fallthru
        _
      %p475 = scmp.le.s32.totalorder 2, %s36
      // Predicated region
      $region60: #{tpu_custom_call.1} parent=5 // pred_check
        %p476 = pneg %p475
      $region61: #{tpu_custom_call.1} parent=5 // pred_check_branch
        %478 = sbr.rel (%p476) target = $region63
      $region62: #{tpu_custom_call.1} parent=5 // pred_region
        %s479 = ssub.s32 %s36, 2
        // Predicated region
        $region64: #{tpu_custom_call.1} parent=62 // pred_check
          %p480 = pneg %p139
        $region65: #{tpu_custom_call.1} parent=62 // pred_check_branch
          %482 = sbr.rel (%p480) target = $region67
        $region66: #{tpu_custom_call.1} parent=62 // pred_region
          %s483 = sand.u32 %s124, 1
          %s484 = scalar_lea.sflag [#allocation10], %s483
          %s485 = sand.u32 %s124, 1
          %s486 = smul.addr %s485, 128
          %s487 = scalar_lea.vmem [#allocation11], %s486
          %488 = dma.done %s484, 2048
        $region67: #{tpu_custom_call.1} parent=62 // pred_fallthru
          _
      $region63: #{tpu_custom_call.1} parent=5 // pred_fallthru
        _
    $region6: #{tpu_custom_call.1} parent=1 // loop_footer
      %s40 = sadd.s32 1, %s36
    $region7: #{tpu_custom_call.1} parent=1 // loop_footer_branch
      %35 = sbr.rel target = $region3
    $region8: #{tpu_custom_call.1} parent=1 // loop_exit
      _
    %489 = vsyncpa [#allocation9], 1
    %s490 = scalar_lea.sflag [#allocation9], 1
    %491 = vsyncpa %s490, 1
    %492 = vsyncpa [#allocation10], 1
    %s493 = scalar_lea.sflag [#allocation10], 1
    %494 = vsyncpa %s493, 1

</llo_original>
